<compile_context>
chip_gen: v6e
topology: v6e:2x2x1
jax: 0.10.0
libtpu: 0.0.40
codegen_flags: <defaults>
</compile_context>

<pallas_src>
import functools

import jax
import jax.numpy as jnp
from jax.experimental import pallas as pl
from jax.experimental.pallas import tpu as pltpu


def _tv_loss_kernel(x_ref, out_ref, acc_ref, *, inv_count_h, inv_count_w, scale):
    """x_ref: (T, H, W) f32 block of images; accumulates the scaled TV sum."""
    i = pl.program_id(0)

    @pl.when(i == 0)
    def _init():
        acc_ref[...] = jnp.zeros_like(acc_ref)

    x = x_ref[...]                       # (T, H, W) f32, VPU-only elementwise work
    dh = x[:, 1:, :] - x[:, :-1, :]      # vertical neighbor differences
    dw = x[:, :, 1:] - x[:, :, :-1]      # horizontal neighbor differences

    acc_ref[...] += (jnp.sum(dh * dh) * inv_count_h
                     + jnp.sum(dw * dw) * inv_count_w)

    @pl.when(i == pl.num_programs(0) - 1)
    def _finalize():
        out_ref[...] = acc_ref[...] * scale


def _pick_tile_bc(bc, h, w, target_bytes=2 << 20):
    """Choose how many (H, W) images to process per grid step.

    Accounts for (8, 128) VMEM tiling padding so small spatial dims don't blow
    past the scoped VMEM limit. Prefers a divisor of `bc` (no padding); falls
    back to zero-padding the BC axis only when divisors are poor.
    Returns (tile_bc, pad_images).
    """
    padded_img_bytes = (-(-h // 8) * 8) * (-(-w // 128) * 128) * 4
    cap = max(1, min(bc, target_bytes // padded_img_bytes))
    t = cap
    while bc % t:
        t -= 1
    if t * 4 >= cap or t == bc:
        return t, 0
    # Divisors of bc are all tiny: pad instead (zero images contribute 0 TV).
    pad = (-bc) % cap
    return cap, pad


def smoth_tv_loss(x, tv_loss_weight=1.0):
    """Pallas TPU implementation of smoth.forward(x) for NCHW f32 input."""
    x = jnp.asarray(x, jnp.float32)
    assert x.ndim == 4, "expected NCHW input"
    b, c, h, w = x.shape
    assert h >= 2 and w >= 2, "TV loss needs H >= 2 and W >= 2"

    bc = b * c
    x3 = x.reshape(bc, h, w)             # contiguous leading-dim merge: free, no copy

    tile_bc, pad = _pick_tile_bc(bc, h, w)
    if pad:
        # Zero images contribute exactly zero to both TV terms -> no in-kernel mask.
        x3 = jnp.concatenate([x3, jnp.zeros((pad, h, w), jnp.float32)], axis=0)
    grid = ((bc + pad) // tile_bc,)

    inv_count_h = 1.0 / float((h - 1) * w)
    inv_count_w = 1.0 / float(h * (w - 1))
    scale = float(tv_loss_weight) * 2.0 / float(b)

    kernel = functools.partial(
        _tv_loss_kernel,
        inv_count_h=inv_count_h,
        inv_count_w=inv_count_w,
        scale=scale,
    )

    out = pl.pallas_call(
        kernel,
        out_shape=jax.ShapeDtypeStruct((1, 1), jnp.float32),
        grid_spec=pltpu.PrefetchScalarGridSpec(
            num_scalar_prefetch=0,
            grid=grid,
            in_specs=[
                pl.BlockSpec((tile_bc, h, w), lambda i: (i, 0, 0)),
            ],
            out_specs=pl.BlockSpec((1, 1), lambda i: (0, 0)),
            scratch_shapes=[pltpu.VMEM((1, 1), jnp.float32)],
        ),
        compiler_params=pltpu.CompilerParams(
            # Carried accumulator across grid steps -> sequential reduction axis.
            dimension_semantics=("arbitrary",),
        ),
    )(x3)

    return out[0, 0]


def smoth_tv_loss_ref(x, tv_loss_weight=1.0):
    """Pure-JAX reference matching the PyTorch module."""
    x = jnp.asarray(x, jnp.float32)
    b = x.shape[0]
    h, w = x.shape[2], x.shape[3]
    count_h = (h - 1) * w
    count_w = h * (w - 1)
    h_tv = jnp.sum((x[:, :, 1:, :] - x[:, :, :h - 1, :]) ** 2)
    w_tv = jnp.sum((x[:, :, :, 1:] - x[:, :, :, :w - 1]) ** 2)
    return tv_loss_weight * 2 * (h_tv / count_h + w_tv / count_w) / b


if __name__ == "__main__":
    key = jax.random.PRNGKey(0)
    # NCHW input like the module expects: batch=2, channels=4, spatial=16x16.
    x = jax.random.uniform(key, (2, 4, 16, 16), jnp.float32)

    out = smoth_tv_loss(x)
    out = jax.block_until_ready(out)

    expected = smoth_tv_loss_ref(x)
    assert jnp.allclose(out, expected, rtol=1e-5, atol=1e-5), (out, expected)

    print("KERNEL_OK")
</pallas_src>

<mosaic_0001>
module attributes {stable_mosaic.version = 11 : i64} {
  func.func @_tv_loss_kernel(%arg0: i32, %arg1: memref<8x16x16xf32, #tpu.memory_space<vmem>>, %arg2: memref<1x1xf32, #tpu.memory_space<vmem>>, %arg3: memref<1x1xf32, #tpu.memory_space<vmem>>) attributes {dimension_semantics = [#tpu.dimension_semantics<arbitrary>], iteration_bounds = array<i64: 1>, scalar_prefetch = 0 : i64, scratch_operands = 1 : i64, tpu.core_type = #tpu.core_type<tc>, window_params = [{transform_indices = @transform_0, window_bounds = array<i64: 8, 16, 16>}, {pipeline_mode = #tpu.pipeline_mode<synchronous>, transform_indices = @transform_1, window_bounds = array<i64: 1, 1>}]} {
    %c0_i32 = arith.constant 0 : i32
    %0 = arith.cmpi eq, %arg0, %c0_i32 : i32
    %1 = arith.extui %0 : i1 to i32
    %c0_i32_0 = arith.constant 0 : i32
    %2 = arith.cmpi ne, %1, %c0_i32_0 : i32
    scf.if %2 {
      %cst_12 = arith.constant 0.000000e+00 : f32
      %30 = vector.broadcast %cst_12 : f32 to vector<1x1xf32>
      %c0_13 = arith.constant 0 : index
      %c0_14 = arith.constant 0 : index
      %31 = vector.load %arg3[%c0_13, %c0_14] : memref<1x1xf32, #tpu.memory_space<vmem>>, vector<1x1xf32>
      tpu.vector_store %arg3[%c0_13, %c0_14], %30 {strides = array<i32>} : memref<1x1xf32, #tpu.memory_space<vmem>>, vector<1x1xf32>,
    } else {
    }
    %c0 = arith.constant 0 : index
    %c0_1 = arith.constant 0 : index
    %c0_2 = arith.constant 0 : index
    %3 = vector.load %arg1[%c0, %c0_1, %c0_2] : memref<8x16x16xf32, #tpu.memory_space<vmem>>, vector<8x16x16xf32>
    %4 = vector.extract_strided_slice %3 {offsets = [0, 1, 0], sizes = [8, 15, 16], strides = [1, 1, 1]} : vector<8x16x16xf32> to vector<8x15x16xf32>
    %5 = vector.extract_strided_slice %3 {offsets = [0, 0, 0], sizes = [8, 15, 16], strides = [1, 1, 1]} : vector<8x16x16xf32> to vector<8x15x16xf32>
    %6 = arith.subf %4, %5 : vector<8x15x16xf32>
    %7 = vector.extract_strided_slice %3 {offsets = [0, 0, 1], sizes = [8, 16, 15], strides = [1, 1, 1]} : vector<8x16x16xf32> to vector<8x16x15xf32>
    %8 = vector.extract_strided_slice %3 {offsets = [0, 0, 0], sizes = [8, 16, 15], strides = [1, 1, 1]} : vector<8x16x16xf32> to vector<8x16x15xf32>
    %9 = arith.subf %7, %8 : vector<8x16x15xf32>
    %c0_3 = arith.constant 0 : index
    %c0_4 = arith.constant 0 : index
    %10 = vector.load %arg3[%c0_3, %c0_4] : memref<1x1xf32, #tpu.memory_space<vmem>>, vector<1x1xf32>
    %11 = arith.mulf %6, %6 : vector<8x15x16xf32>
    %12 = vector.shape_cast %11 : vector<8x15x16xf32> to vector<1x8x15x16xf32>
    %cst = arith.constant dense<0.000000e+00> : vector<1xf32>
    %13 = vector.multi_reduction <add>, %12, %cst [1, 2, 3] : vector<1x8x15x16xf32> to vector<1xf32>
    %14 = vector.shape_cast %13 : vector<1xf32> to vector<1x1x1x1xf32>
    %15 = vector.extract %14[0, 0, 0, 0] : f32 from vector<1x1x1x1xf32>
    %cst_5 = arith.constant 0.00416666688 : f32
    %16 = arith.mulf %15, %cst_5 : f32
    %17 = arith.mulf %9, %9 : vector<8x16x15xf32>
    %18 = vector.shape_cast %17 : vector<8x16x15xf32> to vector<1x8x16x15xf32>
    %cst_6 = arith.constant dense<0.000000e+00> : vector<1xf32>
    %19 = vector.multi_reduction <add>, %18, %cst_6 [1, 2, 3] : vector<1x8x16x15xf32> to vector<1xf32>
    %20 = vector.shape_cast %19 : vector<1xf32> to vector<1x1x1x1xf32>
    %21 = vector.extract %20[0, 0, 0, 0] : f32 from vector<1x1x1x1xf32>
    %cst_7 = arith.constant 0.00416666688 : f32
    %22 = arith.mulf %21, %cst_7 : f32
    %23 = arith.addf %16, %22 : f32
    %24 = vector.broadcast %23 : f32 to vector<1x1xf32>
    %25 = arith.addf %10, %24 : vector<1x1xf32>
    %c0_8 = arith.constant 0 : index
    %c0_9 = arith.constant 0 : index
    %26 = vector.load %arg3[%c0_8, %c0_9] : memref<1x1xf32, #tpu.memory_space<vmem>>, vector<1x1xf32>
    tpu.vector_store %arg3[%c0_8, %c0_9], %25 {strides = array<i32>} : memref<1x1xf32, #tpu.memory_space<vmem>>, vector<1x1xf32>,
    %c0_i32_10 = arith.constant 0 : i32
    %27 = arith.cmpi eq, %arg0, %c0_i32_10 : i32
    %28 = arith.extui %27 : i1 to i32
    %c0_i32_11 = arith.constant 0 : i32
    %29 = arith.cmpi ne, %28, %c0_i32_11 : i32
    scf.if %29 {
      %c0_12 = arith.constant 0 : index
      %c0_13 = arith.constant 0 : index
      %30 = vector.load %arg3[%c0_12, %c0_13] : memref<1x1xf32, #tpu.memory_space<vmem>>, vector<1x1xf32>
      %cst_14 = arith.constant 1.000000e+00 : f32
      %31 = vector.broadcast %cst_14 : f32 to vector<1x1xf32>
      %32 = arith.mulf %30, %31 : vector<1x1xf32>
      %c0_15 = arith.constant 0 : index
      %c0_16 = arith.constant 0 : index
      %33 = vector.load %arg2[%c0_15, %c0_16] : memref<1x1xf32, #tpu.memory_space<vmem>>, vector<1x1xf32>
      tpu.vector_store %arg2[%c0_15, %c0_16], %32 {strides = array<i32>} : memref<1x1xf32, #tpu.memory_space<vmem>>, vector<1x1xf32>,
    } else {
    }
    return
  }
  func.func @transform_0(%arg0: i32) -> (i32, i32, i32) {
    %c0_i32 = arith.constant 0 : i32
    %c0_i32_0 = arith.constant 0 : i32
    %c0_i32_1 = arith.constant 0 : i32
    return %arg0, %c0_i32, %c0_i32_0 : i32, i32, i32
  }
  func.func @transform_1(%arg0: i32) -> (i32, i32) {
    %c0_i32 = arith.constant 0 : i32
    %c0_i32_0 = arith.constant 0 : i32
    %c0_i32_1 = arith.constant 0 : i32
    return %c0_i32, %c0_i32_0 : i32, i32
  }
}

</mosaic_0001>

<llo_original>
// kernel: tpu_custom_call.1
$region0: #{tpu_custom_call.1}
  #allocation0 [shape = 'u32[]', space=smem, size = 0x4, offset = 0x4, fixed_abs, tag = 'smem constant byte address 0x4 - core index']
  #allocation1 [shape = 'u32[144,128]{1,0:T(1,128)}', space=vmem, size = 0x12000, scoped, tag = 'internal scratch']
  #allocation2 [shape = 'f32[1,1]{1,0:T(1,128)}', space=vmem, size = 0x200, scoped, tag = 'scratch operand']
  %s0 = inlined_call_operand.hbm [shape: f32[8,16,16], index: 0, kind: input, shape index: {}]
  %s1 = inlined_call_operand.hbm [shape: f32[1,1], index: 1, kind: output, shape index: {}]
  %s2 = sld [smem:[#allocation0]]
  $region26: #{tpu_custom_call.1} parent=0
    _
  %s4 = ssub.s32 1, %s2
  %s5 = scalar_select 0, %s4, %s2
  $region1: #{tpu_custom_call.1} parent=0
    #allocation3 [shape = 'u8[65536]{0}', space=vmem, size = 0x10000, scoped, tag = 'input window, operand 0, single buffered']
    #allocation4 [shape = 's32[1]{0}', space=sflag, size = 0x4, scoped, tag = 'scoped memory for tpu_custom_call.1']
    #allocation5 [shape = 's32[1]{0}', space=sflag, size = 0x4, scoped, tag = 'scoped memory for tpu_custom_call.1']
    #allocation6 [shape = 'u8[512]{0}', space=vmem, size = 0x400, scoped, tag = 'output window, operand 0, single buffered']
    %6 = vsyncpa [#allocation4], 0
    %7 = vsyncpa [#allocation5], 0
    // Predicated region
    $region2: #{tpu_custom_call.1} parent=1 // pred_check
      _
    $region3: #{tpu_custom_call.1} parent=1 // pred_check_branch
      %9 = sbr.rel (0) target = $region5
    $region4: #{tpu_custom_call.1} parent=1 // pred_region
      %s11 = ssub.s32 2048, 2048
      %12 = vsyncadd [#allocation4], %s11
      %s13 = sshll.u32 [#allocation3], 4
      %s14 = int_to_ptr.vmem [resolvable:$true] %s13
      %19 = dma.hbm_to_vmem [thread:$0]  %s0, 2048, %s14, [#allocation4], 128, 128, 8
    $region5: #{tpu_custom_call.1} parent=1 // pred_fallthru
      _
    // Predicated region
    $region6: #{tpu_custom_call.1} parent=1 // pred_check
      _
    $region7: #{tpu_custom_call.1} parent=1 // pred_check_branch
      %21 = sbr.rel (0) target = $region9
    $region8: #{tpu_custom_call.1} parent=1 // pred_region
      %22 = dma.done [#allocation4], 2048
    $region9: #{tpu_custom_call.1} parent=1 // pred_fallthru
      _
    %p23 = scmp.eq.s32.totalorder 0, 0
    // Predicated region
    $region10: #{tpu_custom_call.1} parent=1 // pred_check
      %p24 = pneg %p23
    $region11: #{tpu_custom_call.1} parent=1 // pred_check_branch
      %26 = sbr.rel (%p24) target = $region13
    $region12: #{tpu_custom_call.1} parent=1 // pred_region
      %vm27 = vcmask 0
      %28 = vst.msk [vmem:[#allocation2] sm:$0x1] %vm27, 0.0
    $region13: #{tpu_custom_call.1} parent=1 // pred_fallthru
      _
    %v29 = vld [vmem:[#allocation3] sm:$0xff]
    %v30 = vld [vmem:[#allocation3 + $0x8] sm:$0xff]
    %v31 = vld [vmem:[#allocation3 + $0x10] sm:$0xff]
    %v32 = vld [vmem:[#allocation3 + $0x18] sm:$0xff]
    %v33 = vld [vmem:[#allocation3 + $0x20] sm:$0xff]
    %v34 = vld [vmem:[#allocation3 + $0x28] sm:$0xff]
    %v35 = vld [vmem:[#allocation3 + $0x30] sm:$0xff]
    %v36 = vld [vmem:[#allocation3 + $0x38] sm:$0xff]
    %v37 = vld [vmem:[#allocation3 + $0x40] sm:$0xff]
    %v38 = vld [vmem:[#allocation3 + $0x48] sm:$0xff]
    %v39 = vld [vmem:[#allocation3 + $0x50] sm:$0xff]
    %v40 = vld [vmem:[#allocation3 + $0x58] sm:$0xff]
    %v41 = vld [vmem:[#allocation3 + $0x60] sm:$0xff]
    %v42 = vld [vmem:[#allocation3 + $0x68] sm:$0xff]
    %v43 = vld [vmem:[#allocation3 + $0x70] sm:$0xff]
    %v44 = vld [vmem:[#allocation3 + $0x78] sm:$0xff]
    %vm61 = vcmask 1040384
    %v62 = vrot.slane %v29, 7
    %v63 = vrot.slane %v30, 7
    %v64 = vsel %vm61, %v62, %v63
    %v65 = vrot.slane %v31, 7
    %v66 = vrot.slane %v32, 7
    %v67 = vsel %vm61, %v65, %v66
    %v68 = vrot.slane %v33, 7
    %v69 = vrot.slane %v34, 7
    %v70 = vsel %vm61, %v68, %v69
    %v71 = vrot.slane %v35, 7
    %v72 = vrot.slane %v36, 7
    %v73 = vsel %vm61, %v71, %v72
    %v74 = vrot.slane %v37, 7
    %v75 = vrot.slane %v38, 7
    %v76 = vsel %vm61, %v74, %v75
    %v77 = vrot.slane %v39, 7
    %v78 = vrot.slane %v40, 7
    %v79 = vsel %vm61, %v77, %v78
    %v80 = vrot.slane %v41, 7
    %v81 = vrot.slane %v42, 7
    %v82 = vsel %vm61, %v80, %v81
    %v83 = vrot.slane %v43, 7
    %v84 = vrot.slane %v44, 7
    %v85 = vsel %vm61, %v83, %v84
    %v102 = vsub.f32 %v29, %v62
    %v103 = vsub.f32 %v30, %v64
    %v104 = vsub.f32 %v31, %v65
    %v105 = vsub.f32 %v32, %v67
    %v106 = vsub.f32 %v33, %v68
    %v107 = vsub.f32 %v34, %v70
    %v108 = vsub.f32 %v35, %v71
    %v109 = vsub.f32 %v36, %v73
    %v110 = vsub.f32 %v37, %v74
    %v111 = vsub.f32 %v38, %v76
    %v112 = vsub.f32 %v39, %v77
    %v113 = vsub.f32 %v40, %v79
    %v114 = vsub.f32 %v41, %v80
    %v115 = vsub.f32 %v42, %v82
    %v116 = vsub.f32 %v43, %v83
    %v117 = vsub.f32 %v44, %v85
    %118 = vrot.lane.b32.xlu0 %v29, 1
    %v119 = vpop.permute.xlu0 %118
    %120 = vrot.lane.b32.xlu0 %v30, 1
    %v121 = vpop.permute.xlu0 %120
    %122 = vrot.lane.b32.xlu0 %v31, 1
    %v123 = vpop.permute.xlu0 %122
    %124 = vrot.lane.b32.xlu0 %v32, 1
    %v125 = vpop.permute.xlu0 %124
    %126 = vrot.lane.b32.xlu0 %v33, 1
    %v127 = vpop.permute.xlu0 %126
    %128 = vrot.lane.b32.xlu0 %v34, 1
    %v129 = vpop.permute.xlu0 %128
    %130 = vrot.lane.b32.xlu0 %v35, 1
    %v131 = vpop.permute.xlu0 %130
    %132 = vrot.lane.b32.xlu0 %v36, 1
    %v133 = vpop.permute.xlu0 %132
    %134 = vrot.lane.b32.xlu0 %v37, 1
    %v135 = vpop.permute.xlu0 %134
    %136 = vrot.lane.b32.xlu0 %v38, 1
    %v137 = vpop.permute.xlu0 %136
    %138 = vrot.lane.b32.xlu0 %v39, 1
    %v139 = vpop.permute.xlu0 %138
    %140 = vrot.lane.b32.xlu0 %v40, 1
    %v141 = vpop.permute.xlu0 %140
    %142 = vrot.lane.b32.xlu0 %v41, 1
    %v143 = vpop.permute.xlu0 %142
    %144 = vrot.lane.b32.xlu0 %v42, 1
    %v145 = vpop.permute.xlu0 %144
    %146 = vrot.lane.b32.xlu0 %v43, 1
    %v147 = vpop.permute.xlu0 %146
    %148 = vrot.lane.b32.xlu0 %v44, 1
    %v149 = vpop.permute.xlu0 %148
    %v166 = vsub.f32 %v29, %v119
    %v167 = vsub.f32 %v30, %v121
    %v168 = vsub.f32 %v31, %v123
    %v169 = vsub.f32 %v32, %v125
    %v170 = vsub.f32 %v33, %v127
    %v171 = vsub.f32 %v34, %v129
    %v172 = vsub.f32 %v35, %v131
    %v173 = vsub.f32 %v36, %v133
    %v174 = vsub.f32 %v37, %v135
    %v175 = vsub.f32 %v38, %v137
    %v176 = vsub.f32 %v39, %v139
    %v177 = vsub.f32 %v40, %v141
    %v178 = vsub.f32 %v41, %v143
    %v179 = vsub.f32 %v42, %v145
    %v180 = vsub.f32 %v43, %v147
    %v181 = vsub.f32 %v44, %v149
    %v182 = vld [vmem:[#allocation2] sm:$0x1]
    %v183 = vmul.f32 %v102, %v102
    %v184 = vmul.f32 %v103, %v103
    %v185 = vmul.f32 %v104, %v104
    %v186 = vmul.f32 %v105, %v105
    %v187 = vmul.f32 %v106, %v106
    %v188 = vmul.f32 %v107, %v107
    %v189 = vmul.f32 %v108, %v108
    %v190 = vmul.f32 %v109, %v109
    %v191 = vmul.f32 %v110, %v110
    %v192 = vmul.f32 %v111, %v111
    %v193 = vmul.f32 %v112, %v112
    %v194 = vmul.f32 %v113, %v113
    %v195 = vmul.f32 %v114, %v114
    %v196 = vmul.f32 %v115, %v115
    %v197 = vmul.f32 %v116, %v116
    %v198 = vmul.f32 %v117, %v117
    %vm215 = vcmask 1046528
    %v216 = vrot.slane %v183, 1
    %v217 = vrot.slane %v184, 1
    %v218 = vsel %vm215, %v216, %v217
    %v219 = vrot.slane %v185, 1
    %v220 = vrot.slane %v186, 1
    %v221 = vsel %vm215, %v219, %v220
    %v222 = vrot.slane %v187, 1
    %v223 = vrot.slane %v188, 1
    %v224 = vsel %vm215, %v222, %v223
    %v225 = vrot.slane %v189, 1
    %v226 = vrot.slane %v190, 1
    %v227 = vsel %vm215, %v225, %v226
    %v228 = vrot.slane %v191, 1
    %v229 = vrot.slane %v192, 1
    %v230 = vsel %vm215, %v228, %v229
    %v231 = vrot.slane %v193, 1
    %v232 = vrot.slane %v194, 1
    %v233 = vsel %vm215, %v231, %v232
    %v234 = vrot.slane %v195, 1
    %v235 = vrot.slane %v196, 1
    %v236 = vsel %vm215, %v234, %v235
    %v237 = vrot.slane %v197, 1
    %v238 = vrot.slane %v198, 1
    %v239 = vsel %vm215, %v237, %v238
    %vm256 = vcmask 130048
    %v257 = vsel %vm256, %v218, 0.0
    %vm258 = vcmask 129024
    %v259 = vsel %vm258, %v217, 0.0
    %v260 = vadd.f32 %v257, %v259
    %v261 = vsel %vm256, %v221, 0.0
    %v262 = vadd.f32 %v260, %v261
    %v263 = vsel %vm258, %v220, 0.0
    %v264 = vadd.f32 %v262, %v263
    %v265 = vsel %vm256, %v224, 0.0
    %v266 = vadd.f32 %v264, %v265
    %v267 = vsel %vm258, %v223, 0.0
    %v268 = vadd.f32 %v266, %v267
    %v269 = vsel %vm256, %v227, 0.0
    %v270 = vadd.f32 %v268, %v269
    %v271 = vsel %vm258, %v226, 0.0
    %v272 = vadd.f32 %v270, %v271
    %v273 = vsel %vm256, %v230, 0.0
    %v274 = vadd.f32 %v272, %v273
    %v275 = vsel %vm258, %v229, 0.0
    %v276 = vadd.f32 %v274, %v275
    %v277 = vsel %vm256, %v233, 0.0
    %v278 = vadd.f32 %v276, %v277
    %v279 = vsel %vm258, %v232, 0.0
    %v280 = vadd.f32 %v278, %v279
    %v281 = vsel %vm256, %v236, 0.0
    %v282 = vadd.f32 %v280, %v281
    %v283 = vsel %vm258, %v235, 0.0
    %v284 = vadd.f32 %v282, %v283
    %v285 = vsel %vm256, %v239, 0.0
    %v286 = vadd.f32 %v284, %v285
    %v287 = vsel %vm258, %v238, 0.0
    %v288 = vadd.f32 %v286, %v287
    %289 = vadd.xlane.f32.xlu0 %v288
    %v290 = vpop.xlane.xlu0 %289
    %v291 = vrot.slane %v290, 4
    %v292 = vadd.f32 %v290, %v291
    %v293 = vrot.slane %v292, 2
    %v294 = vadd.f32 %v292, %v293
    %v295 = vrot.slane %v294, 1
    %v296 = vadd.f32 %v294, %v295
    %s297 = vtos %v296
    %s298 = smul.f32 %s297, 0.004166667
    %v299 = vmul.f32 %v166, %v166
    %v300 = vmul.f32 %v167, %v167
    %v301 = vmul.f32 %v168, %v168
    %v302 = vmul.f32 %v169, %v169
    %v303 = vmul.f32 %v170, %v170
    %v304 = vmul.f32 %v171, %v171
    %v305 = vmul.f32 %v172, %v172
    %v306 = vmul.f32 %v173, %v173
    %v307 = vmul.f32 %v174, %v174
    %v308 = vmul.f32 %v175, %v175
    %v309 = vmul.f32 %v176, %v176
    %v310 = vmul.f32 %v177, %v177
    %v311 = vmul.f32 %v178, %v178
    %v312 = vmul.f32 %v179, %v179
    %v313 = vmul.f32 %v180, %v180
    %v314 = vmul.f32 %v181, %v181
    %331 = vrot.lane.b32.xlu0 %v299, 127
    %v332 = vpop.permute.xlu0 %331
    %333 = vrot.lane.b32.xlu0 %v300, 127
    %v334 = vpop.permute.xlu0 %333
    %335 = vrot.lane.b32.xlu0 %v301, 127
    %v336 = vpop.permute.xlu0 %335
    %337 = vrot.lane.b32.xlu0 %v302, 127
    %v338 = vpop.permute.xlu0 %337
    %339 = vrot.lane.b32.xlu0 %v303, 127
    %v340 = vpop.permute.xlu0 %339
    %341 = vrot.lane.b32.xlu0 %v304, 127
    %v342 = vpop.permute.xlu0 %341
    %343 = vrot.lane.b32.xlu0 %v305, 127
    %v344 = vpop.permute.xlu0 %343
    %345 = vrot.lane.b32.xlu0 %v306, 127
    %v346 = vpop.permute.xlu0 %345
    %347 = vrot.lane.b32.xlu0 %v307, 127
    %v348 = vpop.permute.xlu0 %347
    %349 = vrot.lane.b32.xlu0 %v308, 127
    %v350 = vpop.permute.xlu0 %349
    %351 = vrot.lane.b32.xlu0 %v309, 127
    %v352 = vpop.permute.xlu0 %351
    %353 = vrot.lane.b32.xlu0 %v310, 127
    %v354 = vpop.permute.xlu0 %353
    %355 = vrot.lane.b32.xlu0 %v311, 127
    %v356 = vpop.permute.xlu0 %355
    %357 = vrot.lane.b32.xlu0 %v312, 127
    %v358 = vpop.permute.xlu0 %357
    %359 = vrot.lane.b32.xlu0 %v313, 127
    %v360 = vpop.permute.xlu0 %359
    %361 = vrot.lane.b32.xlu0 %v314, 127
    %v362 = vpop.permute.xlu0 %361
    %vm379 = vcmask 121856
    %v380 = vsel %vm379, %v332, 0.0
    %v381 = vsel %vm379, %v334, 0.0
    %v382 = vadd.f32 %v380, %v381
    %v383 = vsel %vm379, %v336, 0.0
    %v384 = vadd.f32 %v382, %v383
    %v385 = vsel %vm379, %v338, 0.0
    %v386 = vadd.f32 %v384, %v385
    %v387 = vsel %vm379, %v340, 0.0
    %v388 = vadd.f32 %v386, %v387
    %v389 = vsel %vm379, %v342, 0.0
    %v390 = vadd.f32 %v388, %v389
    %v391 = vsel %vm379, %v344, 0.0
    %v392 = vadd.f32 %v390, %v391
    %v393 = vsel %vm379, %v346, 0.0
    %v394 = vadd.f32 %v392, %v393
    %v395 = vsel %vm379, %v348, 0.0
    %v396 = vadd.f32 %v394, %v395
    %v397 = vsel %vm379, %v350, 0.0
    %v398 = vadd.f32 %v396, %v397
    %v399 = vsel %vm379, %v352, 0.0
    %v400 = vadd.f32 %v398, %v399
    %v401 = vsel %vm379, %v354, 0.0
    %v402 = vadd.f32 %v400, %v401
    %v403 = vsel %vm379, %v356, 0.0
    %v404 = vadd.f32 %v402, %v403
    %v405 = vsel %vm379, %v358, 0.0
    %v406 = vadd.f32 %v404, %v405
    %v407 = vsel %vm379, %v360, 0.0
    %v408 = vadd.f32 %v406, %v407
    %v409 = vsel %vm379, %v362, 0.0
    %v410 = vadd.f32 %v408, %v409
    %411 = vadd.xlane.f32.xlu0 %v410
    %v412 = vpop.xlane.xlu0 %411
    %v413 = vrot.slane %v412, 4
    %v414 = vadd.f32 %v412, %v413
    %v415 = vrot.slane %v414, 2
    %v416 = vadd.f32 %v414, %v415
    %v417 = vrot.slane %v416, 1
    %v418 = vadd.f32 %v416, %v417
    %s419 = vtos %v418
    %s420 = smul.f32 %s419, 0.004166667
    %s421 = sadd.f32 %s298, %s420
    %v422 = vstv %s421
    %v423 = vadd.f32 %v182, %v422
    %vm424 = vcmask 0
    %425 = vst.msk [vmem:[#allocation2] sm:$0x1] %vm424, %v423
    // Predicated region
    $region14: #{tpu_custom_call.1} parent=1 // pred_check
      %p426 = pneg %p23
    $region15: #{tpu_custom_call.1} parent=1 // pred_check_branch
      %428 = sbr.rel (%p426) target = $region17
    $region16: #{tpu_custom_call.1} parent=1 // pred_region
      %v429 = vld [vmem:[#allocation2] sm:$0x1]
      %430 = vst.msk [vmem:[#allocation6] sm:$0x1] %vm424, %v429
    $region17: #{tpu_custom_call.1} parent=1 // pred_fallthru
      _
    // Predicated region
    $region18: #{tpu_custom_call.1} parent=1 // pred_check
      _
    $region19: #{tpu_custom_call.1} parent=1 // pred_check_branch
      %432 = sbr.rel (0) target = $region21
    $region20: #{tpu_custom_call.1} parent=1 // pred_region
      %s434 = ssub.s32 16, 16
      %435 = vsyncadd [#allocation5], %s434
      %s437 = sshll.u32 [#allocation6], 4
      %s438 = int_to_ptr.vmem [resolvable:$true] %s437
      %440 = dma.vmem_to_hbm [thread:$0]  %s438, 16, %s1, [#allocation5]
    $region21: #{tpu_custom_call.1} parent=1 // pred_fallthru
      _
    // Predicated region
    $region22: #{tpu_custom_call.1} parent=1 // pred_check
      _
    $region23: #{tpu_custom_call.1} parent=1 // pred_check_branch
      %442 = sbr.rel (0) target = $region25
    $region24: #{tpu_custom_call.1} parent=1 // pred_region
      %443 = dma.done [#allocation5], 16
    $region25: #{tpu_custom_call.1} parent=1 // pred_fallthru
      _
    %444 = vsyncpa [#allocation4], 1
    %445 = vsyncpa [#allocation5], 1

</llo_original>
